<compile_context>
chip_gen: v7x
topology: tpu7x:2x2x1
jax: 0.10.0
libtpu: 0.0.40
codegen_flags: <defaults>
</compile_context>

<pallas_src>
import jax
import jax.numpy as jnp
from jax.experimental import pallas as pl
from jax.experimental.pallas import tpu as pltpu


def _round_up(n, m):
    return (n + m - 1) // m * m


# ---------------------------------------------------------------------------
# One-time parameter packing (hoisted out of the forward path).
# Slab layout (all f32, width W = max(H0, 8), unused entries zero):
#   rows [r_w0 : r_w0+H0), cols [0:S)  : W0 state part   (H0, S)   (out-major)
#   rows [r_w1 : r_w1+H1), cols [0:H0) : W1 hidden part  (H1, H0)  (out-major)
#   rows [r_sm : r_sm+max(H0,H1)), small column vectors:
#       col 0 : W0 action column (H0,)
#       col 1 : b0               (H0,)
#       col 2 : W1 action column (H1,)
#       col 3 : b1               (H1,)
#       col 4 : Wh head weights  (H1,)
#       col 5 : bh at row 0
# ---------------------------------------------------------------------------
def _pack_params(params):
    w0 = jnp.asarray(params["w0"], jnp.float32)   # (H0, S+1)  torch (out, in)
    b0 = jnp.asarray(params["b0"], jnp.float32)   # (H0,)
    w1 = jnp.asarray(params["w1"], jnp.float32)   # (H1, H0+1)
    b1 = jnp.asarray(params["b1"], jnp.float32)   # (H1,)
    wh = jnp.asarray(params["wh"], jnp.float32)   # (1, H1)
    bh = jnp.asarray(params["bh"], jnp.float32)   # (1,)

    H0, sp1 = w0.shape
    S = sp1 - 1
    H1 = w1.shape[0]
    W = max(H0, 8)

    r_w0 = 0
    r_w1 = _round_up(H0, 8)
    r_sm = r_w1 + _round_up(H1, 8)
    rows = r_sm + _round_up(max(H0, H1), 8)

    slab = jnp.zeros((rows, W), jnp.float32)
    slab = slab.at[r_w0:r_w0 + H0, :S].set(w0[:, :S])
    slab = slab.at[r_w1:r_w1 + H1, :H0].set(w1[:, :H0])
    slab = slab.at[r_sm:r_sm + H0, 0].set(w0[:, S])
    slab = slab.at[r_sm:r_sm + H0, 1].set(b0)
    slab = slab.at[r_sm:r_sm + H1, 2].set(w1[:, H0])
    slab = slab.at[r_sm:r_sm + H1, 3].set(b1)
    slab = slab.at[r_sm:r_sm + H1, 4].set(wh.reshape(-1))
    slab = slab.at[r_sm, 5].set(jnp.reshape(bh, ()))

    dims = dict(S=S, H0=H0, H1=H1, W=W, r_w0=r_w0, r_w1=r_w1, r_sm=r_sm, rows=rows)
    return slab, dims


def _make_forward(dims, act_dtype=jnp.float32):
    S, H0, H1, W = dims["S"], dims["H0"], dims["H1"], dims["W"]
    r_w0, r_w1, r_sm, rows = dims["r_w0"], dims["r_w1"], dims["r_sm"], dims["rows"]

    f32 = jnp.float32
    if jnp.dtype(act_dtype) == jnp.dtype(f32):
        low = lambda v: v                      # pure f32 path (v5e-safe, exact)
    else:
        low = lambda v: v.astype(act_dtype)    # bf16 activations (v6e/v7x only)

    def kernel(state_ref, action_ref, slab_ref, out_ref):
        # Batch-on-lanes: state (S, BT), action (1, BT), output (1, BT).
        a = action_ref[...]                               # (1, BT)

        # Small parameter vectors: static ref sub-views (zero-cost).
        w0a = slab_ref[r_sm:r_sm + H0, 0:1]               # (H0, 1)
        b0 = slab_ref[r_sm:r_sm + H0, 1:2]                # (H0, 1)
        w1a = slab_ref[r_sm:r_sm + H1, 2:3]               # (H1, 1)
        b1 = slab_ref[r_sm:r_sm + H1, 3:4]                # (H1, 1)
        whc = slab_ref[r_sm:r_sm + H1, 4:5]               # (H1, 1)
        bh = slab_ref[r_sm:r_sm + 1, 5:6]                 # (1, 1)

        # Layer 0: K = S is tiny, so use S broadcast FMAs on the VPU instead of
        # a degenerate MXU contraction.   z0 = W0x @ x + a * w0a + b0  (H0, BT)
        z0 = a * w0a + b0
        for k in range(S):
            z0 = z0 + slab_ref[r_w0:r_w0 + H0, k:k + 1] * state_ref[k:k + 1, :]
        h0 = jnp.tanh(low(z0))                            # (H0, BT)

        # Layer 1: the real contraction (K = H0) on the MXU.
        w1x = low(slab_ref[r_w1:r_w1 + H1, 0:H0])         # (H1, H0)
        z1 = jnp.dot(w1x, h0, preferred_element_type=f32) + a * w1a + b1
        h1 = jnp.tanh(low(z1))                            # (H1, BT)

        # Head: per-lane matvec = VPU mul + sublane (XLU) reduce -> (1, BT).
        zh = jnp.sum((h1 * low(whc)).astype(f32), axis=0, keepdims=True) + bh
        out_ref[...] = jax.nn.sigmoid(zh)

    @jax.jit
    def forward(state, action, slab):
        # Transpose once in the wrapper so the batch rides the lane axis.
        st = state.reshape(state.shape[0], -1).astype(f32).T      # (S, B)
        at = action.reshape(action.shape[0], -1).astype(f32).T    # (1, B)
        B = st.shape[1]

        # Lane-dense batch tiling:
        #  * small B  -> one step, block == full array (no 128-divisibility req)
        #  * large B  -> >= 2 balanced, 128-aligned steps so v7x's two
        #    TensorCores both get work; capped at 4096 lanes/tile.
        if B <= 512:
            BT = B
        else:
            BT = min(4096, _round_up(pl.cdiv(B, 2), 128))

        out = pl.pallas_call(
            kernel,
            out_shape=jax.ShapeDtypeStruct((1, B), f32),
            grid=(pl.cdiv(B, BT),),
            in_specs=[
                pl.BlockSpec((S, BT), lambda i: (0, i)),
                pl.BlockSpec((1, BT), lambda i: (0, i)),
                pl.BlockSpec((rows, W), lambda i: (0, 0)),   # weights: constant block
            ],
            out_specs=pl.BlockSpec((1, BT), lambda i: (0, i)),
            compiler_params=pltpu.CompilerParams(
                dimension_semantics=("parallel",)),
        )(st, at, slab)

        return out.reshape(B, 1)   # (1, B) -> (B, 1): pure reshape (unit dim)

    return forward


def build_uncertainty_nn2(params, act_dtype=jnp.float32):
    """One-time prep: pack params into a slab and return forward(state, action).

    act_dtype=jnp.bfloat16 enables bf16 activations (v6e/v7x only; loosens
    accuracy vs the f32 reference).  Default f32 is exact and v5e-safe.
    """
    slab, dims = _pack_params(params)
    fwd = _make_forward(dims, act_dtype)
    return lambda state, action: fwd(state, action, slab)


# ---------------------------------------------------------------------------
# Pure-JAX reference mirroring the PyTorch forward exactly.
# ---------------------------------------------------------------------------
def _ref_forward(state, action, params):
    x = state.reshape(state.shape[0], -1).astype(jnp.float32)
    a = action.reshape(action.shape[0], -1).astype(jnp.float32)
    x = jnp.concatenate([x, a], axis=1)
    x = jnp.tanh(x @ params["w0"].T + params["b0"])
    x = jnp.concatenate([x, a], axis=1)
    x = jnp.tanh(x @ params["w1"].T + params["b1"])
    return jax.nn.sigmoid(x @ params["wh"].T + params["bh"])


def _init_params(key, state_size, layers_features):
    """Deterministic init mimicking torch.nn.Linear default."""
    action_size = 1
    params = {}
    k = key

    def linear(k, fan_in, fan_out):
        k, kw, kb = jax.random.split(k, 3)
        bound = 1.0 / jnp.sqrt(fan_in)
        w = jax.random.uniform(kw, (fan_out, fan_in), jnp.float32, -bound, bound)
        b = jax.random.uniform(kb, (fan_out,), jnp.float32, -bound, bound)
        return k, w, b

    k, params["w0"], params["b0"] = linear(k, state_size + action_size, layers_features[0])
    k, params["w1"], params["b1"] = linear(k, layers_features[0] + action_size, layers_features[1])
    k, params["wh"], params["bh"] = linear(k, layers_features[1], 1)
    return params


if __name__ == "__main__":
    key = jax.random.PRNGKey(0)
    k_state, k_action, k_params = jax.random.split(key, 3)

    # Module config: layers_type = ['fc', 'fc'], layers_features = [32, 32]
    B, S = 8, 4
    layers_features = [32, 32]

    state = jax.random.normal(k_state, (B, S), dtype=jnp.float32)
    action = jax.random.randint(k_action, (B, 1), 0, 4).astype(jnp.float32)
    params = _init_params(k_params, S, layers_features)

    forward = build_uncertainty_nn2(params)   # one-time param packing / jit build

    out = jax.block_until_ready(forward(state, action))
    ref = _ref_forward(state, action, params)
    assert out.shape == (B, 1)
    assert jnp.allclose(out, ref, atol=1e-5, rtol=1e-5), (out, ref)

    # Multi-tile + ragged-final-tile path (B not a multiple of the 128-aligned
    # lane tile) — exercises the output-writeback clipping noted in review.
    B2 = 700
    k_s2, k_a2 = jax.random.split(k_action)
    state2 = jax.random.normal(k_s2, (B2, S), dtype=jnp.float32)
    action2 = jax.random.randint(k_a2, (B2, 1), 0, 4).astype(jnp.float32)
    out2 = jax.block_until_ready(forward(state2, action2))
    ref2 = _ref_forward(state2, action2, params)
    assert out2.shape == (B2, 1)
    assert jnp.allclose(out2, ref2, atol=1e-4, rtol=1e-4), float(
        jnp.max(jnp.abs(out2 - ref2)))

    print("KERNEL_OK")
</pallas_src>

<mosaic_0001>
module attributes {stable_mosaic.version = 11 : i64} {
  func.func @kernel(%arg0: i32, %arg1: memref<4x8xf32, #tpu.memory_space<vmem>>, %arg2: memref<1x8xf32, #tpu.memory_space<vmem>>, %arg3: memref<96x32xf32, #tpu.memory_space<vmem>>, %arg4: memref<1x8xf32, #tpu.memory_space<vmem>>) attributes {dimension_semantics = [#tpu.dimension_semantics<parallel>], iteration_bounds = array<i64: 1>, scalar_prefetch = 0 : i64, scratch_operands = 0 : i64, tpu.core_type = #tpu.core_type<tc>, window_params = [{transform_indices = @transform_0, window_bounds = array<i64: 4, 8>}, {transform_indices = @transform_1, window_bounds = array<i64: 1, 8>}, {pipeline_mode = #tpu.pipeline_mode<synchronous>, transform_indices = @transform_2, window_bounds = array<i64: 96, 32>}, {transform_indices = @transform_3, window_bounds = array<i64: 1, 8>}]} {
    %c0 = arith.constant 0 : index
    %c0_0 = arith.constant 0 : index
    %0 = vector.load %arg2[%c0, %c0_0] : memref<1x8xf32, #tpu.memory_space<vmem>>, vector<1x8xf32>
    %c64 = arith.constant 64 : index
    %c0_1 = arith.constant 0 : index
    %1 = vector.load %arg3[%c64, %c0_1] : memref<96x32xf32, #tpu.memory_space<vmem>>, vector<32x1xf32>
    %c64_2 = arith.constant 64 : index
    %c1 = arith.constant 1 : index
    %2 = vector.load %arg3[%c64_2, %c1] : memref<96x32xf32, #tpu.memory_space<vmem>>, vector<32x1xf32>
    %c64_3 = arith.constant 64 : index
    %c2 = arith.constant 2 : index
    %3 = vector.load %arg3[%c64_3, %c2] : memref<96x32xf32, #tpu.memory_space<vmem>>, vector<32x1xf32>
    %c64_4 = arith.constant 64 : index
    %c3 = arith.constant 3 : index
    %4 = vector.load %arg3[%c64_4, %c3] : memref<96x32xf32, #tpu.memory_space<vmem>>, vector<32x1xf32>
    %c64_5 = arith.constant 64 : index
    %c4 = arith.constant 4 : index
    %5 = vector.load %arg3[%c64_5, %c4] : memref<96x32xf32, #tpu.memory_space<vmem>>, vector<32x1xf32>
    %c64_6 = arith.constant 64 : index
    %c5 = arith.constant 5 : index
    %6 = vector.load %arg3[%c64_6, %c5] : memref<96x32xf32, #tpu.memory_space<vmem>>, vector<1x1xf32>
    %7 = vector.broadcast %0 : vector<1x8xf32> to vector<32x8xf32>
    %8 = vector.broadcast %1 : vector<32x1xf32> to vector<32x8xf32>
    %9 = arith.mulf %7, %8 : vector<32x8xf32>
    %10 = vector.broadcast %2 : vector<32x1xf32> to vector<32x8xf32>
    %11 = arith.addf %9, %10 : vector<32x8xf32>
    %c0_7 = arith.constant 0 : index
    %c0_8 = arith.constant 0 : index
    %12 = vector.load %arg3[%c0_7, %c0_8] : memref<96x32xf32, #tpu.memory_space<vmem>>, vector<32x1xf32>
    %c0_9 = arith.constant 0 : index
    %c0_10 = arith.constant 0 : index
    %13 = vector.load %arg1[%c0_9, %c0_10] : memref<4x8xf32, #tpu.memory_space<vmem>>, vector<1x8xf32>
    %14 = vector.broadcast %12 : vector<32x1xf32> to vector<32x8xf32>
    %15 = vector.broadcast %13 : vector<1x8xf32> to vector<32x8xf32>
    %16 = arith.mulf %14, %15 : vector<32x8xf32>
    %17 = arith.addf %11, %16 : vector<32x8xf32>
    %c0_11 = arith.constant 0 : index
    %c1_12 = arith.constant 1 : index
    %18 = vector.load %arg3[%c0_11, %c1_12] : memref<96x32xf32, #tpu.memory_space<vmem>>, vector<32x1xf32>
    %c1_13 = arith.constant 1 : index
    %c0_14 = arith.constant 0 : index
    %19 = vector.load %arg1[%c1_13, %c0_14] : memref<4x8xf32, #tpu.memory_space<vmem>>, vector<1x8xf32>
    %20 = vector.broadcast %18 : vector<32x1xf32> to vector<32x8xf32>
    %21 = vector.broadcast %19 : vector<1x8xf32> to vector<32x8xf32>
    %22 = arith.mulf %20, %21 : vector<32x8xf32>
    %23 = arith.addf %17, %22 : vector<32x8xf32>
    %c0_15 = arith.constant 0 : index
    %c2_16 = arith.constant 2 : index
    %24 = vector.load %arg3[%c0_15, %c2_16] : memref<96x32xf32, #tpu.memory_space<vmem>>, vector<32x1xf32>
    %c2_17 = arith.constant 2 : index
    %c0_18 = arith.constant 0 : index
    %25 = vector.load %arg1[%c2_17, %c0_18] : memref<4x8xf32, #tpu.memory_space<vmem>>, vector<1x8xf32>
    %26 = vector.broadcast %24 : vector<32x1xf32> to vector<32x8xf32>
    %27 = vector.broadcast %25 : vector<1x8xf32> to vector<32x8xf32>
    %28 = arith.mulf %26, %27 : vector<32x8xf32>
    %29 = arith.addf %23, %28 : vector<32x8xf32>
    %c0_19 = arith.constant 0 : index
    %c3_20 = arith.constant 3 : index
    %30 = vector.load %arg3[%c0_19, %c3_20] : memref<96x32xf32, #tpu.memory_space<vmem>>, vector<32x1xf32>
    %c3_21 = arith.constant 3 : index
    %c0_22 = arith.constant 0 : index
    %31 = vector.load %arg1[%c3_21, %c0_22] : memref<4x8xf32, #tpu.memory_space<vmem>>, vector<1x8xf32>
    %32 = vector.broadcast %30 : vector<32x1xf32> to vector<32x8xf32>
    %33 = vector.broadcast %31 : vector<1x8xf32> to vector<32x8xf32>
    %34 = arith.mulf %32, %33 : vector<32x8xf32>
    %35 = arith.addf %29, %34 : vector<32x8xf32>
    %36 = math.tanh %35 : vector<32x8xf32>
    %c32 = arith.constant 32 : index
    %c0_23 = arith.constant 0 : index
    %37 = vector.load %arg3[%c32, %c0_23] : memref<96x32xf32, #tpu.memory_space<vmem>>, vector<32x32xf32>
    %cst = arith.constant dense<0.000000e+00> : vector<32x8xf32>
    %38 = tpu.matmul %37, %36, %cst {dimension_numbers = #tpu.dot_dimension_numbers<[1], [0], [0], [1], [0, 0, 1, 1], [], []>} : vector<32x32xf32>, vector<32x8xf32>, vector<32x8xf32> -> vector<32x8xf32>
    %39 = vector.broadcast %0 : vector<1x8xf32> to vector<32x8xf32>
    %40 = vector.broadcast %3 : vector<32x1xf32> to vector<32x8xf32>
    %41 = arith.mulf %39, %40 : vector<32x8xf32>
    %42 = arith.addf %38, %41 : vector<32x8xf32>
    %43 = vector.broadcast %4 : vector<32x1xf32> to vector<32x8xf32>
    %44 = arith.addf %42, %43 : vector<32x8xf32>
    %45 = math.tanh %44 : vector<32x8xf32>
    %46 = vector.broadcast %5 : vector<32x1xf32> to vector<32x8xf32>
    %47 = arith.mulf %45, %46 : vector<32x8xf32>
    %cst_24 = arith.constant dense<0.000000e+00> : vector<8xf32>
    %48 = vector.multi_reduction <add>, %47, %cst_24 [0] : vector<32x8xf32> to vector<8xf32>
    %49 = vector.shape_cast %48 : vector<8xf32> to vector<1x8xf32>
    %50 = vector.broadcast %6 : vector<1x1xf32> to vector<1x8xf32>
    %51 = arith.addf %49, %50 : vector<1x8xf32>
    %52 = arith.negf %51 : vector<1x8xf32>
    %53 = math.exp %52 : vector<1x8xf32>
    %cst_25 = arith.constant 1.000000e+00 : f32
    %54 = vector.broadcast %cst_25 : f32 to vector<1x8xf32>
    %55 = arith.addf %54, %53 : vector<1x8xf32>
    %56 = arith.divf %54, %55 : vector<1x8xf32>
    %c0_26 = arith.constant 0 : index
    %c0_27 = arith.constant 0 : index
    %57 = vector.load %arg4[%c0_26, %c0_27] : memref<1x8xf32, #tpu.memory_space<vmem>>, vector<1x8xf32>
    tpu.vector_store %arg4[%c0_26, %c0_27], %56 {strides = array<i32>} : memref<1x8xf32, #tpu.memory_space<vmem>>, vector<1x8xf32>,
    return
  }
  func.func @transform_0(%arg0: i32) -> (i32, i32) {
    %c0_i32 = arith.constant 0 : i32
    %c0_i32_0 = arith.constant 0 : i32
    return %c0_i32, %arg0 : i32, i32
  }
  func.func @transform_1(%arg0: i32) -> (i32, i32) {
    %c0_i32 = arith.constant 0 : i32
    %c0_i32_0 = arith.constant 0 : i32
    return %c0_i32, %arg0 : i32, i32
  }
  func.func @transform_2(%arg0: i32) -> (i32, i32) {
    %c0_i32 = arith.constant 0 : i32
    %c0_i32_0 = arith.constant 0 : i32
    %c0_i32_1 = arith.constant 0 : i32
    return %c0_i32, %c0_i32_0 : i32, i32
  }
  func.func @transform_3(%arg0: i32) -> (i32, i32) {
    %c0_i32 = arith.constant 0 : i32
    %c0_i32_0 = arith.constant 0 : i32
    return %c0_i32, %arg0 : i32, i32
  }
}

</mosaic_0001>

<llo_original>
// kernel: forward.1
$region0: #{forward.1}
  #allocation0 [shape = 'u32[]', space=smem, size = 0x4, offset = 0x4, fixed_abs, tag = 'smem constant byte address 0x4 - core index']
  #allocation1 [shape = 'u32[144,128]{1,0:T(1,128)}', space=vmem, size = 0x12000, scoped, tag = 'internal scratch']
  %s0 = inlined_call_operand.vmem [shape: f32[4,8], index: 0, kind: input, shape index: {}]
  %s1 = inlined_call_operand.vmem [shape: f32[1,8], index: 1, kind: input, shape index: {}]
  %s2 = inlined_call_operand.vmem [shape: f32[96,32], index: 2, kind: input, shape index: {}]
  %s3 = inlined_call_operand.hbm [shape: f32[1,8], index: 3, kind: output, shape index: {}]
  %s4 = sld [smem:[#allocation0]]
  $region22: #{forward.1} parent=0
    _
  %s6 = ssub.s32 1, %s4
  %s7 = scalar_select 0, %s6, %s4
  $region1: #{forward.1} parent=0
    #allocation2 [shape = 'u8[512]{0}', space=vmem, size = 0x400, scoped, tag = 'output window, operand 0, single buffered']
    #allocation3 [shape = 's32[1]{0}', space=sflag, size = 0x4, scoped, tag = 'scoped memory for forward.1']
    %8 = vsyncpa [#allocation3], 0
    // Predicated region
    $region2: #{forward.1} parent=1 // pred_check
      _
    $region3: #{forward.1} parent=1 // pred_check_branch
      %10 = sbr.rel (0) target = $region5
    $region4: #{forward.1} parent=1 // pred_region
      _
    $region5: #{forward.1} parent=1 // pred_fallthru
      _
    // Predicated region
    $region6: #{forward.1} parent=1 // pred_check
      _
    $region7: #{forward.1} parent=1 // pred_check_branch
      %12 = sbr.rel (0) target = $region9
    $region8: #{forward.1} parent=1 // pred_region
      _
    $region9: #{forward.1} parent=1 // pred_fallthru
      _
    // Predicated region
    $region10: #{forward.1} parent=1 // pred_check
      _
    $region11: #{forward.1} parent=1 // pred_check_branch
      %14 = sbr.rel (0) target = $region13
    $region12: #{forward.1} parent=1 // pred_region
      _
    $region13: #{forward.1} parent=1 // pred_fallthru
      _
    %v15 = vld [vmem:[%s1] sm:$0x1]
    %v16 = vld [vmem:[%s2 + $0x40] sm:$0xff]
    %v17 = vld [vmem:[%s2 + $0x48] sm:$0xff]
    %v18 = vld [vmem:[%s2 + $0x50] sm:$0xff]
    %v19 = vld [vmem:[%s2 + $0x58] sm:$0xff]
    %v20 = vld [vmem:[%s2 + $0x40] sm:$0x1]
    %v22 = vlaneseq
    %v23 = vshrl.u32 %v22, 7
    %v24 = vsub.s32 0, %v23
    %v25 = vrot.slane %v15, %v24
    %28 = vset.pattern.permute.xlu0 0
    %29 = vperm.xlu0 %28, %v16
    %v30 = vpop.permute.xlu0 %29
    %33 = vset.pattern.permute.xlu0 0
    %34 = vperm.xlu0 %33, %v17
    %v35 = vpop.permute.xlu0 %34
    %38 = vset.pattern.permute.xlu0 0
    %39 = vperm.xlu0 %38, %v18
    %v40 = vpop.permute.xlu0 %39
    %43 = vset.pattern.permute.xlu0 0
    %44 = vperm.xlu0 %43, %v19
    %v45 = vpop.permute.xlu0 %44
    %v47 = vmul.f32 %v25, %v30
    %v48 = vmul.f32 %v25, %v35
    %v49 = vmul.f32 %v25, %v40
    %v50 = vmul.f32 %v25, %v45
    %51 = vset.pattern.permute.xlu0 1
    %52 = vperm.xlu0 %51, %v16
    %v53 = vpop.permute.xlu0 %52
    %55 = vset.pattern.permute.xlu0 1
    %56 = vperm.xlu0 %55, %v17
    %v57 = vpop.permute.xlu0 %56
    %59 = vset.pattern.permute.xlu0 1
    %60 = vperm.xlu0 %59, %v18
    %v61 = vpop.permute.xlu0 %60
    %63 = vset.pattern.permute.xlu0 1
    %64 = vperm.xlu0 %63, %v19
    %v65 = vpop.permute.xlu0 %64
    %v67 = vadd.f32 %v47, %v53
    %v68 = vadd.f32 %v48, %v57
    %v69 = vadd.f32 %v49, %v61
    %v70 = vadd.f32 %v50, %v65
    %v71 = vld [vmem:[%s2] sm:$0xff]
    %v72 = vld [vmem:[%s2 + $0x8] sm:$0xff]
    %v73 = vld [vmem:[%s2 + $0x10] sm:$0xff]
    %v74 = vld [vmem:[%s2 + $0x18] sm:$0xff]
    %v75 = vld [vmem:[%s0] sm:$0x1]
    %77 = vset.pattern.permute.xlu0 0
    %78 = vperm.xlu0 %77, %v71
    %v79 = vpop.permute.xlu0 %78
    %82 = vset.pattern.permute.xlu0 0
    %83 = vperm.xlu0 %82, %v72
    %v84 = vpop.permute.xlu0 %83
    %87 = vset.pattern.permute.xlu0 0
    %88 = vperm.xlu0 %87, %v73
    %v89 = vpop.permute.xlu0 %88
    %92 = vset.pattern.permute.xlu0 0
    %93 = vperm.xlu0 %92, %v74
    %v94 = vpop.permute.xlu0 %93
    %v96 = vlaneseq
    %v97 = vshrl.u32 %v96, 7
    %v98 = vsub.s32 0, %v97
    %v99 = vrot.slane %v75, %v98
    %v100 = vmul.f32 %v79, %v99
    %v101 = vmul.f32 %v84, %v99
    %v102 = vmul.f32 %v89, %v99
    %v103 = vmul.f32 %v94, %v99
    %v104 = vadd.f32 %v67, %v100
    %v105 = vadd.f32 %v68, %v101
    %v106 = vadd.f32 %v69, %v102
    %v107 = vadd.f32 %v70, %v103
    %v108 = vld [vmem:[%s0 + $0x1] sm:$0x1]
    %109 = vset.pattern.permute.xlu0 1
    %110 = vperm.xlu0 %109, %v71
    %v111 = vpop.permute.xlu0 %110
    %113 = vset.pattern.permute.xlu0 1
    %114 = vperm.xlu0 %113, %v72
    %v115 = vpop.permute.xlu0 %114
    %117 = vset.pattern.permute.xlu0 1
    %118 = vperm.xlu0 %117, %v73
    %v119 = vpop.permute.xlu0 %118
    %121 = vset.pattern.permute.xlu0 1
    %122 = vperm.xlu0 %121, %v74
    %v123 = vpop.permute.xlu0 %122
    %v125 = vlaneseq
    %v126 = vshrl.u32 %v125, 7
    %v127 = vsub.s32 0, %v126
    %v128 = vrot.slane %v108, %v127
    %v129 = vmul.f32 %v111, %v128
    %v130 = vmul.f32 %v115, %v128
    %v131 = vmul.f32 %v119, %v128
    %v132 = vmul.f32 %v123, %v128
    %v133 = vadd.f32 %v104, %v129
    %v134 = vadd.f32 %v105, %v130
    %v135 = vadd.f32 %v106, %v131
    %v136 = vadd.f32 %v107, %v132
    %v137 = vld [vmem:[%s0 + $0x2] sm:$0x1]
    %138 = vset.pattern.permute.xlu0 2
    %139 = vperm.xlu0 %138, %v71
    %v140 = vpop.permute.xlu0 %139
    %142 = vset.pattern.permute.xlu0 2
    %143 = vperm.xlu0 %142, %v72
    %v144 = vpop.permute.xlu0 %143
    %146 = vset.pattern.permute.xlu0 2
    %147 = vperm.xlu0 %146, %v73
    %v148 = vpop.permute.xlu0 %147
    %150 = vset.pattern.permute.xlu0 2
    %151 = vperm.xlu0 %150, %v74
    %v152 = vpop.permute.xlu0 %151
    %v154 = vlaneseq
    %v155 = vshrl.u32 %v154, 7
    %v156 = vsub.s32 0, %v155
    %v157 = vrot.slane %v137, %v156
    %v158 = vmul.f32 %v140, %v157
    %v159 = vmul.f32 %v144, %v157
    %v160 = vmul.f32 %v148, %v157
    %v161 = vmul.f32 %v152, %v157
    %v162 = vadd.f32 %v133, %v158
    %v163 = vadd.f32 %v134, %v159
    %v164 = vadd.f32 %v135, %v160
    %v165 = vadd.f32 %v136, %v161
    %v166 = vld [vmem:[%s0 + $0x3] sm:$0x1]
    %167 = vset.pattern.permute.xlu0 3
    %168 = vperm.xlu0 %167, %v71
    %v169 = vpop.permute.xlu0 %168
    %171 = vset.pattern.permute.xlu0 3
    %172 = vperm.xlu0 %171, %v72
    %v173 = vpop.permute.xlu0 %172
    %175 = vset.pattern.permute.xlu0 3
    %176 = vperm.xlu0 %175, %v73
    %v177 = vpop.permute.xlu0 %176
    %179 = vset.pattern.permute.xlu0 3
    %180 = vperm.xlu0 %179, %v74
    %v181 = vpop.permute.xlu0 %180
    %v183 = vlaneseq
    %v184 = vshrl.u32 %v183, 7
    %v185 = vsub.s32 0, %v184
    %v186 = vrot.slane %v166, %v185
    %v187 = vmul.f32 %v169, %v186
    %v188 = vmul.f32 %v173, %v186
    %v189 = vmul.f32 %v177, %v186
    %v190 = vmul.f32 %v181, %v186
    %v191 = vadd.f32 %v162, %v187
    %v192 = vadd.f32 %v163, %v188
    %v193 = vadd.f32 %v164, %v189
    %v194 = vadd.f32 %v165, %v190
    %v195 = vtanh.pop %v191
    %v196 = vtanh.pop %v192
    %v197 = vtanh.pop %v193
    %v198 = vtanh.pop %v194
    %v199 = vld [vmem:[%s2 + $0x20] sm:$0xff]
    %v200 = vld [vmem:[%s2 + $0x28] sm:$0xff]
    %v201 = vld [vmem:[%s2 + $0x30] sm:$0xff]
    %v202 = vld [vmem:[%s2 + $0x38] sm:$0xff]
    %203 = vset.pattern.permute.xlu0 2
    %204 = vperm.xlu0 %203, %v16
    %v205 = vpop.permute.xlu0 %204
    %207 = vset.pattern.permute.xlu0 2
    %208 = vperm.xlu0 %207, %v17
    %v209 = vpop.permute.xlu0 %208
    %211 = vset.pattern.permute.xlu0 2
    %212 = vperm.xlu0 %211, %v18
    %v213 = vpop.permute.xlu0 %212
    %215 = vset.pattern.permute.xlu0 2
    %216 = vperm.xlu0 %215, %v19
    %v217 = vpop.permute.xlu0 %216
    %v219 = vmul.f32 %v25, %v205
    %v220 = vmul.f32 %v25, %v209
    %v221 = vmul.f32 %v25, %v213
    %v222 = vmul.f32 %v25, %v217
    %vm223 = vcmask 261120
    %v225 = vsel %vm223, %v199, 0
    %v228 = vsel %vm223, %v200, 0
    %v231 = vsel %vm223, %v201, 0
    %v234 = vsel %vm223, %v202, 0
    %236 = vmatprep.subr.mxu0 0.0
    %237 = vmatpush1.msra.mxu0 %v195
    %238 = vmatprep.subr.mxu0 0.0
    %239 = vmatpush1.msra.mxu0 %v196
    %240 = vmatprep.subr.mxu0 0.0
    %241 = vmatpush1.msra.mxu0 %v197
    %242 = vmatprep.subr.mxu0 0.0
    %243 = vmatpush1.msra.mxu0 %v198
    %244 = vmatprep.subr.mxu0 0.0
    %245 = vmatpush1.msra.mxu0 0.0
    %246 = vmatprep.subr.mxu0 0.0
    %247 = vmatpush1.msra.mxu0 0.0
    %248 = vmatprep.subr.mxu0 0.0
    %249 = vmatpush1.msra.mxu0 0.0
    %250 = vmatprep.subr.mxu0 0.0
    %251 = vmatpush1.msra.mxu0 0.0
    %252 = vmatprep.subr.mxu0 0.0
    %253 = vmatpush1.msra.mxu0 0.0
    %254 = vmatprep.subr.mxu0 0.0
    %255 = vmatpush1.msra.mxu0 0.0
    %256 = vmatprep.subr.mxu0 0.0
    %257 = vmatpush1.msra.mxu0 0.0
    %258 = vmatprep.subr.mxu0 0.0
    %259 = vmatpush1.msra.mxu0 0.0
    %260 = vmatprep.subr.mxu0 0.0
    %261 = vmatpush1.msra.mxu0 0.0
    %262 = vmatprep.subr.mxu0 0.0
    %263 = vmatpush1.msra.mxu0 0.0
    %264 = vmatprep.subr.mxu0 0.0
    %265 = vmatpush1.msra.mxu0 0.0
    %266 = vmatprep.subr.mxu0 0.0
    %267 = vmatpush1.msra.mxu0 0.0
    %268 = vmatprep.subr.mxu0 0.0
    %269 = vmatpush1.msra.mxu0 0.0
    %270 = vmatprep.subr.mxu0 0.0
    %271 = vmatpush1.msra.mxu0 0.0
    %272 = vmatprep.subr.mxu0 0.0
    %273 = vmatpush1.msra.mxu0 0.0
    %274 = vmatprep.subr.mxu0 0.0
    %275 = vmatpush1.msra.mxu0 0.0
    %276 = vmatprep.subr.mxu0 0.0
    %277 = vmatpush1.msra.mxu0 0.0
    %278 = vmatprep.subr.mxu0 0.0
    %279 = vmatpush1.msra.mxu0 0.0
    %280 = vmatprep.subr.mxu0 0.0
    %281 = vmatpush1.msra.mxu0 0.0
    %282 = vmatprep.subr.mxu0 0.0
    %283 = vmatpush1.msra.mxu0 0.0
    %284 = vmatprep.subr.mxu0 0.0
    %285 = vmatpush1.msra.mxu0 0.0
    %286 = vmatprep.subr.mxu0 0.0
    %287 = vmatpush1.msra.mxu0 0.0
    %288 = vmatprep.subr.mxu0 0.0
    %289 = vmatpush1.msra.mxu0 0.0
    %290 = vmatprep.subr.mxu0 0.0
    %291 = vmatpush1.msra.mxu0 0.0
    %292 = vmatprep.subr.mxu0 0.0
    %293 = vmatpush1.msra.mxu0 0.0
    %294 = vmatprep.subr.mxu0 0.0
    %295 = vmatpush1.msra.mxu0 0.0
    %296 = vmatprep.subr.mxu0 0.0
    %297 = vmatpush1.msra.mxu0 0.0
    %298 = vmatprep.subr.mxu0 0.0
    %299 = vmatpush1.msra.mxu0 0.0
    %300 = vmatprep.mubr.f32.mxu0 0.0
    %301 = vmatmul.mubr.f32.gmra.mrb[0].mxu0 %v225
    %v302 = vpop.f32.mrb[0].mxu0
    %v303 = vadd.f32 %v219, %v302
    %v304 = vpop.f32.mrb[0].mxu0
    %305 = vmatprep.mubr.f32.mxu0 0.0
    %306 = vmatmul.mubr.f32.gmra.mrb[0].mxu0 %v228
    %v307 = vpop.f32.mrb[0].mxu0
    %v308 = vadd.f32 %v220, %v307
    %v309 = vpop.f32.mrb[0].mxu0
    %310 = vmatprep.mubr.f32.mxu0 0.0
    %311 = vmatmul.mubr.f32.gmra.mrb[0].mxu0 %v231
    %v312 = vpop.f32.mrb[0].mxu0
    %v313 = vadd.f32 %v221, %v312
    %v314 = vpop.f32.mrb[0].mxu0
    %315 = vmatprep.mubr.f32.mxu0 0.0
    %316 = vmatmul.mubr.f32.gmra.mrb[0].mxu0 %v234
    %v317 = vpop.f32.mrb[0].mxu0
    %v318 = vadd.f32 %v222, %v317
    %v319 = vpop.f32.mrb[0].mxu0
    %320 = vdwg.mxu0
    %321 = vset.pattern.permute.xlu0 3
    %322 = vperm.xlu0 %321, %v16
    %v323 = vpop.permute.xlu0 %322
    %325 = vset.pattern.permute.xlu0 3
    %326 = vperm.xlu0 %325, %v17
    %v327 = vpop.permute.xlu0 %326
    %329 = vset.pattern.permute.xlu0 3
    %330 = vperm.xlu0 %329, %v18
    %v331 = vpop.permute.xlu0 %330
    %333 = vset.pattern.permute.xlu0 3
    %334 = vperm.xlu0 %333, %v19
    %v335 = vpop.permute.xlu0 %334
    %v337 = vadd.f32 %v303, %v323
    %v338 = vadd.f32 %v308, %v327
    %v339 = vadd.f32 %v313, %v331
    %v340 = vadd.f32 %v318, %v335
    %v341 = vtanh.pop %v337
    %v342 = vtanh.pop %v338
    %v343 = vtanh.pop %v339
    %v344 = vtanh.pop %v340
    %345 = vset.pattern.permute.xlu0 4
    %346 = vperm.xlu0 %345, %v16
    %v347 = vpop.permute.xlu0 %346
    %349 = vset.pattern.permute.xlu0 4
    %350 = vperm.xlu0 %349, %v17
    %v351 = vpop.permute.xlu0 %350
    %353 = vset.pattern.permute.xlu0 4
    %354 = vperm.xlu0 %353, %v18
    %v355 = vpop.permute.xlu0 %354
    %357 = vset.pattern.permute.xlu0 4
    %358 = vperm.xlu0 %357, %v19
    %v359 = vpop.permute.xlu0 %358
    %v361 = vmul.f32 %v341, %v347
    %v362 = vmul.f32 %v342, %v351
    %v363 = vmul.f32 %v343, %v355
    %v364 = vmul.f32 %v344, %v359
    %vm365 = vcmask 64512
    %v366 = vsel %vm365, %v361, 0.0
    %v367 = vsel %vm365, %v362, 0.0
    %v368 = vadd.f32 %v366, %v367
    %v369 = vsel %vm365, %v363, 0.0
    %v370 = vadd.f32 %v368, %v369
    %v371 = vsel %vm365, %v364, 0.0
    %v372 = vadd.f32 %v370, %v371
    %v373 = vrot.slane %v372, 4
    %v374 = vadd.f32 %v372, %v373
    %v375 = vrot.slane %v374, 2
    %v376 = vadd.f32 %v374, %v375
    %v377 = vrot.slane %v376, 1
    %v378 = vadd.f32 %v376, %v377
    %380 = vset.pattern.permute.xlu0 5
    %381 = vperm.xlu0 %380, %v20
    %v382 = vpop.permute.xlu0 %381
    %v384 = vadd.f32 %v378, %v382
    %v385 = vxor.u32 %v384, 2147483648
    %v386 = vmul.f32 %v385, 1.442695
    %v387 = vpow.pop %v386
    %v388 = vadd.f32 %v387, 1.0
    %v389 = vrcp.pop %v388
    %v390 = vmul.f32 1.0, %v389
    %vm391 = vcmask 57344
    %392 = vst.msk [vmem:[#allocation2] sm:$0x1] %vm391, %v390
    // Predicated region
    $region14: #{forward.1} parent=1 // pred_check
      _
    $region15: #{forward.1} parent=1 // pred_check_branch
      %394 = sbr.rel (0) target = $region17
    $region16: #{forward.1} parent=1 // pred_region
      %s396 = ssub.s32 16, 16
      %397 = vsyncadd [#allocation3], %s396
      %s399 = sshll.u32 [#allocation2], 4
      %s400 = int_to_ptr.vmem [resolvable:$true] %s399
      %402 = dma.vmem_to_hbm [thread:$0]  %s400, 16, %s3, [#allocation3]
    $region17: #{forward.1} parent=1 // pred_fallthru
      _
    // Predicated region
    $region18: #{forward.1} parent=1 // pred_check
      _
    $region19: #{forward.1} parent=1 // pred_check_branch
      %404 = sbr.rel (0) target = $region21
    $region20: #{forward.1} parent=1 // pred_region
      %405 = dma.done [#allocation3], 16
    $region21: #{forward.1} parent=1 // pred_fallthru
      _
    %406 = vsyncpa [#allocation3], 1

</llo_original>
